<compile_context>
chip_gen: v7x
topology: tpu7x:2x2x1
jax: 0.10.0
libtpu: 0.0.40
codegen_flags: <defaults>
</compile_context>

<pallas_src>
import functools

import jax
import jax.numpy as jnp
from jax.experimental import pallas as pl
from jax.experimental.pallas import tpu as pltpu


def _round_up(x, m):
    return (x + m - 1) // m * m


def _pick_tiling(n):
    """(row tile, column tile, padded size) for the 2B x 2B similarity matrix."""
    if n <= 128:
        n_pad = _round_up(n, 8)
        return n_pad, n_pad, n_pad            # single tile
    tm = 128
    for tk in (512, 256, 128):
        n_pad = _round_up(n, tk)
        # Largest column tile whose forced padding stays <= 12.5% of real work;
        # tk=128 is always accepted as the fallback.
        if tk == 128 or (n_pad - n) * 8 <= n:
            return tm, tk, n_pad


def _ntxent_kernel(zr_ref, zc_ref, o_ref, m_sc, l_sc, p_sc, *,
                   temperature, n_valid):
    i = pl.program_id(0)                 # row block (parallel)
    k = pl.program_id(1)                 # column block (reduction, innermost)
    tm = zr_ref.shape[0]
    tk = zc_ref.shape[0]

    @pl.when(k == 0)
    def _init():
        m_sc[...] = jnp.full_like(m_sc, -jnp.inf)
        l_sc[...] = jnp.zeros_like(l_sc)
        p_sc[...] = jnp.zeros_like(p_sc)

    # [TM, TK] scores: contract the D axis of both operands (no transpose of z).
    s = jax.lax.dot_general(zr_ref[...], zc_ref[...],
                            dimension_numbers=(((1,), (1,)), ((), ())),
                            preferred_element_type=jnp.float32)
    x = jnp.exp(s * (1.0 / temperature))          # these are the CE *logits*

    row_g = i * tm + jax.lax.broadcasted_iota(jnp.int32, (tm, tk), 0)
    col_g = k * tk + jax.lax.broadcasted_iota(jnp.int32, (tm, tk), 1)

    # Drop the diagonal (masked_select) and any padded columns from the lse.
    invalid = (row_g == col_g) | (col_g >= n_valid)
    x_neg = jnp.where(invalid, -jnp.inf, x)

    # Online (flash-style) logsumexp across column blocks.
    m_prev = m_sc[...]
    m_new = jnp.maximum(m_prev, jnp.max(x_neg, axis=-1, keepdims=True))
    alpha = jnp.exp(m_prev - m_new)
    l_sc[...] = alpha * l_sc[...] + jnp.sum(jnp.exp(x_neg - m_new),
                                            axis=-1, keepdims=True)
    m_sc[...] = m_new

    # Positive logit: column (row+1); the last valid row wraps to column 0.
    # Only the (at most two) column blocks that can contain those columns do
    # the reduce -- everything else skips it (scalar condition -> scf.if).
    row_lo = i * tm
    col_lo = k * tk
    has_next = (col_lo <= row_lo + tm) & (col_lo + tk > row_lo + 1)
    wraps_here = ((k == 0) & (row_lo <= n_valid - 1)
                  & (n_valid - 1 < row_lo + tm))

    @pl.when(has_next | wraps_here)
    def _pos():
        tgt_col = jnp.where(row_g == n_valid - 1, 0, row_g + 1)
        p_sc[...] += jnp.sum(jnp.where(col_g == tgt_col, x, 0.0),
                             axis=-1, keepdims=True)

    @pl.when(k == pl.num_programs(1) - 1)
    def _finalize():
        o_ref[...] = m_sc[...] + jnp.log(l_sc[...]) - p_sc[...]


def ntxent_loss(z_i, z_j, temperature):
    """Pallas implementation of NTXentLoss.forward (returns a scalar)."""
    b, d = z_i.shape
    n = 2 * b
    tm, tk, n_pad = _pick_tiling(n)

    # One O(2B*D) concat/pad kept in the wrapper so a single [2B, D] operand
    # can be indexed by both the row-block and column-block BlockSpecs.
    z = jnp.concatenate([z_i, z_j], axis=0)
    if n_pad != n:
        z = jnp.pad(z, ((0, n_pad - n), (0, 0)))

    n_rows = n_pad // tm
    n_cols = n_pad // tk
    itemsize = jnp.dtype(z.dtype).itemsize

    per_row = pl.pallas_call(
        functools.partial(_ntxent_kernel,
                          temperature=float(temperature), n_valid=n),
        out_shape=jax.ShapeDtypeStruct((n_pad, 1), jnp.float32),
        grid_spec=pltpu.PrefetchScalarGridSpec(
            num_scalar_prefetch=0,
            grid=(n_rows, n_cols),
            in_specs=[pl.BlockSpec((tm, d), lambda i, k: (i, 0)),   # row block
                      pl.BlockSpec((tk, d), lambda i, k: (k, 0))],  # col block
            out_specs=pl.BlockSpec((tm, 1), lambda i, k: (i, 0)),
            scratch_shapes=[pltpu.VMEM((tm, 1), jnp.float32)] * 3),
        compiler_params=pltpu.CompilerParams(
            dimension_semantics=("parallel", "arbitrary")),
        cost_estimate=pl.CostEstimate(
            flops=2 * n_pad * n_pad * d,
            transcendentals=2 * n_pad * n_pad,
            bytes_accessed=n_rows * n_cols * (tm + tk) * d * itemsize
                           + n_pad * 4),
    )(z, z)

    return jnp.sum(per_row[:n, 0]) / jnp.float32(n)


def _ntxent_reference(z_i, z_j, temperature):
    """Plain-JAX reference mirroring the PyTorch forward exactly."""
    b = z_i.shape[0]
    n = 2 * b
    z = jnp.concatenate([z_i, z_j], axis=0)
    x = jnp.exp(z @ z.T / temperature)                      # CE logits [2B, 2B]
    x_off = jnp.where(jnp.eye(n, dtype=bool), -jnp.inf, x)  # diag removed
    lse = jax.scipy.special.logsumexp(x_off, axis=-1)
    # target = arange(2B) % (2B-1) on the diag-removed view == column (row+1)%2B
    picked = x[jnp.arange(n), (jnp.arange(n) + 1) % n]
    return jnp.sum(lse - picked) / n


if __name__ == "__main__":
    temperature = 0.5
    key = jax.random.PRNGKey(0)
    # Configs exercise: single-tile path; multi-block grid with padded columns
    # and the wrap-to-0 target; TK=256 with several column blocks (prune path);
    # TK=512 single column block.
    for (B, D) in [(4, 32), (96, 32), (384, 64), (256, 128)]:
        key, k1, k2 = jax.random.split(key, 3)
        z_i = jax.random.normal(k1, (B, D), dtype=jnp.float32)
        z_j = jax.random.normal(k2, (B, D), dtype=jnp.float32)
        # SimCLR projections are typically L2-normalized before the loss.
        z_i = z_i / jnp.linalg.norm(z_i, axis=-1, keepdims=True)
        z_j = z_j / jnp.linalg.norm(z_j, axis=-1, keepdims=True)

        loss = jax.block_until_ready(ntxent_loss(z_i, z_j, temperature))
        ref = jax.block_until_ready(_ntxent_reference(z_i, z_j, temperature))
        assert jnp.allclose(loss, ref, rtol=1e-4, atol=1e-5), (B, D, loss, ref)

    print("KERNEL_OK")
</pallas_src>

<mosaic_0001>
module attributes {stable_mosaic.version = 11 : i64} {
  func.func @_ntxent_kernel(%arg0: i32, %arg1: i32, %arg2: memref<8x32xf32, #tpu.memory_space<vmem>>, %arg3: memref<8x32xf32, #tpu.memory_space<vmem>>, %arg4: memref<8x1xf32, #tpu.memory_space<vmem>>, %arg5: memref<8x1xf32, #tpu.memory_space<vmem>>, %arg6: memref<8x1xf32, #tpu.memory_space<vmem>>, %arg7: memref<8x1xf32, #tpu.memory_space<vmem>>) attributes {dimension_semantics = [#tpu.dimension_semantics<parallel>, #tpu.dimension_semantics<arbitrary>], iteration_bounds = array<i64: 1, 1>, scalar_prefetch = 0 : i64, scratch_operands = 3 : i64, tpu.core_type = #tpu.core_type<tc>, window_params = [{transform_indices = @transform_0, window_bounds = array<i64: 8, 32>}, {transform_indices = @transform_1, window_bounds = array<i64: 8, 32>}, {transform_indices = @transform_2, window_bounds = array<i64: 8, 1>}]} {
    %c0_i32 = arith.constant 0 : i32
    %0 = arith.cmpi eq, %arg1, %c0_i32 : i32
    %1 = arith.extui %0 : i1 to i32
    %c0_i32_0 = arith.constant 0 : i32
    %2 = arith.cmpi ne, %1, %c0_i32_0 : i32
    scf.if %2 {
      %cst_28 = arith.constant 0xFF800000 : f32
      %59 = vector.broadcast %cst_28 : f32 to vector<8x1xf32>
      %c0_29 = arith.constant 0 : index
      %c0_30 = arith.constant 0 : index
      %60 = vector.load %arg5[%c0_29, %c0_30] : memref<8x1xf32, #tpu.memory_space<vmem>>, vector<8x1xf32>
      tpu.vector_store %arg5[%c0_29, %c0_30], %59 {strides = array<i32>} : memref<8x1xf32, #tpu.memory_space<vmem>>, vector<8x1xf32>,
      %cst_31 = arith.constant 0.000000e+00 : f32
      %61 = vector.broadcast %cst_31 : f32 to vector<8x1xf32>
      %c0_32 = arith.constant 0 : index
      %c0_33 = arith.constant 0 : index
      %62 = vector.load %arg6[%c0_32, %c0_33] : memref<8x1xf32, #tpu.memory_space<vmem>>, vector<8x1xf32>
      tpu.vector_store %arg6[%c0_32, %c0_33], %61 {strides = array<i32>} : memref<8x1xf32, #tpu.memory_space<vmem>>, vector<8x1xf32>,
      %cst_34 = arith.constant 0.000000e+00 : f32
      %63 = vector.broadcast %cst_34 : f32 to vector<8x1xf32>
      %c0_35 = arith.constant 0 : index
      %c0_36 = arith.constant 0 : index
      %64 = vector.load %arg7[%c0_35, %c0_36] : memref<8x1xf32, #tpu.memory_space<vmem>>, vector<8x1xf32>
      tpu.vector_store %arg7[%c0_35, %c0_36], %63 {strides = array<i32>} : memref<8x1xf32, #tpu.memory_space<vmem>>, vector<8x1xf32>,
    } else {
    }
    %c0 = arith.constant 0 : index
    %c0_1 = arith.constant 0 : index
    %3 = vector.load %arg2[%c0, %c0_1] : memref<8x32xf32, #tpu.memory_space<vmem>>, vector<8x32xf32>
    %c0_2 = arith.constant 0 : index
    %c0_3 = arith.constant 0 : index
    %4 = vector.load %arg3[%c0_2, %c0_3] : memref<8x32xf32, #tpu.memory_space<vmem>>, vector<8x32xf32>
    %cst = arith.constant dense<0.000000e+00> : vector<8x8xf32>
    %5 = tpu.matmul %3, %4, %cst {dimension_numbers = #tpu.dot_dimension_numbers<[1], [1], [0], [0], [0, 0, 1, 0], [], []>} : vector<8x32xf32>, vector<8x32xf32>, vector<8x8xf32> -> vector<8x8xf32>
    %cst_4 = arith.constant 2.000000e+00 : f32
    %6 = vector.broadcast %cst_4 : f32 to vector<8x8xf32>
    %7 = arith.mulf %5, %6 : vector<8x8xf32>
    %8 = math.exp %7 : vector<8x8xf32>
    %c8_i32 = arith.constant 8 : i32
    %9 = arith.muli %arg0, %c8_i32 : i32
    %10 = tpu.iota {dimensions = array<i32: 0>} : vector<8x8xi32>
    %11 = vector.broadcast %9 : i32 to vector<8x8xi32>
    %12 = arith.addi %11, %10 : vector<8x8xi32>
    %c8_i32_5 = arith.constant 8 : i32
    %13 = arith.muli %arg1, %c8_i32_5 : i32
    %14 = tpu.iota {dimensions = array<i32: 1>} : vector<8x8xi32>
    %15 = vector.broadcast %13 : i32 to vector<8x8xi32>
    %16 = arith.addi %15, %14 : vector<8x8xi32>
    %17 = arith.cmpi eq, %12, %16 : vector<8x8xi32>
    %c8_i32_6 = arith.constant 8 : i32
    %18 = vector.broadcast %c8_i32_6 : i32 to vector<8x8xi32>
    %19 = arith.cmpi sge, %16, %18 : vector<8x8xi32>
    %20 = arith.ori %17, %19 : vector<8x8xi1>
    %cst_7 = arith.constant 0xFF800000 : f32
    %21 = vector.broadcast %cst_7 : f32 to vector<8x8xf32>
    %22 = arith.select %20, %21, %8 : vector<8x8xi1>, vector<8x8xf32>
    %c0_8 = arith.constant 0 : index
    %c0_9 = arith.constant 0 : index
    %23 = vector.load %arg5[%c0_8, %c0_9] : memref<8x1xf32, #tpu.memory_space<vmem>>, vector<8x1xf32>
    %cst_10 = arith.constant dense<0xFF800000> : vector<8xf32>
    %24 = vector.multi_reduction <maximumf>, %22, %cst_10 [1] : vector<8x8xf32> to vector<8xf32>
    %25 = vector.shape_cast %24 : vector<8xf32> to vector<8x1xf32>
    %26 = arith.maximumf %23, %25 : vector<8x1xf32>
    %27 = arith.subf %23, %26 : vector<8x1xf32>
    %28 = math.exp %27 : vector<8x1xf32>
    %c0_11 = arith.constant 0 : index
    %c0_12 = arith.constant 0 : index
    %29 = vector.load %arg6[%c0_11, %c0_12] : memref<8x1xf32, #tpu.memory_space<vmem>>, vector<8x1xf32>
    %30 = arith.mulf %28, %29 : vector<8x1xf32>
    %31 = vector.broadcast %26 : vector<8x1xf32> to vector<8x8xf32>
    %32 = arith.subf %22, %31 : vector<8x8xf32>
    %33 = math.exp %32 : vector<8x8xf32>
    %cst_13 = arith.constant dense<0.000000e+00> : vector<8xf32>
    %34 = vector.multi_reduction <add>, %33, %cst_13 [1] : vector<8x8xf32> to vector<8xf32>
    %35 = vector.shape_cast %34 : vector<8xf32> to vector<8x1xf32>
    %36 = arith.addf %30, %35 : vector<8x1xf32>
    %c0_14 = arith.constant 0 : index
    %c0_15 = arith.constant 0 : index
    %37 = vector.load %arg6[%c0_14, %c0_15] : memref<8x1xf32, #tpu.memory_space<vmem>>, vector<8x1xf32>
    tpu.vector_store %arg6[%c0_14, %c0_15], %36 {strides = array<i32>} : memref<8x1xf32, #tpu.memory_space<vmem>>, vector<8x1xf32>,
    %c0_16 = arith.constant 0 : index
    %c0_17 = arith.constant 0 : index
    %38 = vector.load %arg5[%c0_16, %c0_17] : memref<8x1xf32, #tpu.memory_space<vmem>>, vector<8x1xf32>
    tpu.vector_store %arg5[%c0_16, %c0_17], %26 {strides = array<i32>} : memref<8x1xf32, #tpu.memory_space<vmem>>, vector<8x1xf32>,
    %c8_i32_18 = arith.constant 8 : i32
    %39 = arith.muli %arg0, %c8_i32_18 : i32
    %c8_i32_19 = arith.constant 8 : i32
    %40 = arith.muli %arg1, %c8_i32_19 : i32
    %c8_i32_20 = arith.constant 8 : i32
    %41 = arith.addi %39, %c8_i32_20 : i32
    %42 = arith.cmpi sle, %40, %41 : i32
    %c8_i32_21 = arith.constant 8 : i32
    %43 = arith.addi %40, %c8_i32_21 : i32
    %c1_i32 = arith.constant 1 : i32
    %44 = arith.addi %39, %c1_i32 : i32
    %45 = arith.cmpi sgt, %43, %44 : i32
    %46 = arith.andi %42, %45 : i1
    %c0_i32_22 = arith.constant 0 : i32
    %47 = arith.cmpi eq, %arg1, %c0_i32_22 : i32
    %c7_i32 = arith.constant 7 : i32
    %48 = arith.cmpi sle, %39, %c7_i32 : i32
    %49 = arith.andi %47, %48 : i1
    %c8_i32_23 = arith.constant 8 : i32
    %50 = arith.addi %39, %c8_i32_23 : i32
    %c7_i32_24 = arith.constant 7 : i32
    %51 = arith.cmpi sgt, %50, %c7_i32_24 : i32
    %52 = arith.andi %49, %51 : i1
    %53 = arith.ori %46, %52 : i1
    %54 = arith.extui %53 : i1 to i32
    %c0_i32_25 = arith.constant 0 : i32
    %55 = arith.cmpi ne, %54, %c0_i32_25 : i32
    scf.if %55 {
      %c7_i32_28 = arith.constant 7 : i32
      %59 = vector.broadcast %c7_i32_28 : i32 to vector<8x8xi32>
      %60 = arith.cmpi eq, %12, %59 : vector<8x8xi32>
      %c1_i32_29 = arith.constant 1 : i32
      %61 = vector.broadcast %c1_i32_29 : i32 to vector<8x8xi32>
      %62 = arith.addi %12, %61 : vector<8x8xi32>
      %c0_i32_30 = arith.constant 0 : i32
      %63 = vector.broadcast %c0_i32_30 : i32 to vector<8x8xi32>
      %64 = arith.select %60, %63, %62 : vector<8x8xi1>, vector<8x8xi32>
      %c0_31 = arith.constant 0 : index
      %c0_32 = arith.constant 0 : index
      %65 = vector.load %arg7[%c0_31, %c0_32] : memref<8x1xf32, #tpu.memory_space<vmem>>, vector<8x1xf32>
      %66 = arith.cmpi eq, %16, %64 : vector<8x8xi32>
      %cst_33 = arith.constant 0.000000e+00 : f32
      %67 = vector.broadcast %cst_33 : f32 to vector<8x8xf32>
      %68 = arith.select %66, %8, %67 : vector<8x8xi1>, vector<8x8xf32>
      %cst_34 = arith.constant dense<0.000000e+00> : vector<8xf32>
      %69 = vector.multi_reduction <add>, %68, %cst_34 [1] : vector<8x8xf32> to vector<8xf32>
      %70 = vector.shape_cast %69 : vector<8xf32> to vector<8x1xf32>
      %71 = arith.addf %65, %70 : vector<8x1xf32>
      %c0_35 = arith.constant 0 : index
      %c0_36 = arith.constant 0 : index
      %72 = vector.load %arg7[%c0_35, %c0_36] : memref<8x1xf32, #tpu.memory_space<vmem>>, vector<8x1xf32>
      tpu.vector_store %arg7[%c0_35, %c0_36], %71 {strides = array<i32>} : memref<8x1xf32, #tpu.memory_space<vmem>>, vector<8x1xf32>,
    } else {
    }
    %c0_i32_26 = arith.constant 0 : i32
    %56 = arith.cmpi eq, %arg1, %c0_i32_26 : i32
    %57 = arith.extui %56 : i1 to i32
    %c0_i32_27 = arith.constant 0 : i32
    %58 = arith.cmpi ne, %57, %c0_i32_27 : i32
    scf.if %58 {
      %c0_28 = arith.constant 0 : index
      %c0_29 = arith.constant 0 : index
      %59 = vector.load %arg5[%c0_28, %c0_29] : memref<8x1xf32, #tpu.memory_space<vmem>>, vector<8x1xf32>
      %c0_30 = arith.constant 0 : index
      %c0_31 = arith.constant 0 : index
      %60 = vector.load %arg6[%c0_30, %c0_31] : memref<8x1xf32, #tpu.memory_space<vmem>>, vector<8x1xf32>
      %61 = math.log %60 : vector<8x1xf32>
      %62 = arith.addf %59, %61 : vector<8x1xf32>
      %c0_32 = arith.constant 0 : index
      %c0_33 = arith.constant 0 : index
      %63 = vector.load %arg7[%c0_32, %c0_33] : memref<8x1xf32, #tpu.memory_space<vmem>>, vector<8x1xf32>
      %64 = arith.subf %62, %63 : vector<8x1xf32>
      %c0_34 = arith.constant 0 : index
      %c0_35 = arith.constant 0 : index
      %65 = vector.load %arg4[%c0_34, %c0_35] : memref<8x1xf32, #tpu.memory_space<vmem>>, vector<8x1xf32>
      tpu.vector_store %arg4[%c0_34, %c0_35], %64 {strides = array<i32>} : memref<8x1xf32, #tpu.memory_space<vmem>>, vector<8x1xf32>,
    } else {
    }
    return
  }
  func.func @transform_0(%arg0: i32, %arg1: i32) -> (i32, i32) {
    %c0_i32 = arith.constant 0 : i32
    %c0_i32_0 = arith.constant 0 : i32
    return %arg0, %c0_i32 : i32, i32
  }
  func.func @transform_1(%arg0: i32, %arg1: i32) -> (i32, i32) {
    %c0_i32 = arith.constant 0 : i32
    %c0_i32_0 = arith.constant 0 : i32
    return %arg1, %c0_i32 : i32, i32
  }
  func.func @transform_2(%arg0: i32, %arg1: i32) -> (i32, i32) {
    %c0_i32 = arith.constant 0 : i32
    %c0_i32_0 = arith.constant 0 : i32
    return %arg0, %c0_i32 : i32, i32
  }
}

</mosaic_0001>

<llo_original>
// kernel: tpu_custom_call.1
$region0: #{tpu_custom_call.1}
  #allocation0 [shape = 'u32[]', space=smem, size = 0x4, offset = 0x4, fixed_abs, tag = 'smem constant byte address 0x4 - core index']
  #allocation1 [shape = 'u32[144,128]{1,0:T(1,128)}', space=vmem, size = 0x12000, scoped, tag = 'internal scratch']
  #allocation2 [shape = 'f32[8,1]{1,0:T(8,128)}', space=vmem, size = 0x1000, scoped, tag = 'scratch operand']
  #allocation3 [shape = 'f32[8,1]{1,0:T(8,128)}', space=vmem, size = 0x1000, scoped, tag = 'scratch operand']
  #allocation4 [shape = 'f32[8,1]{1,0:T(8,128)}', space=vmem, size = 0x1000, scoped, tag = 'scratch operand']
  %s0 = inlined_call_operand.hbm [shape: f32[8,32], index: 0, kind: input, shape index: {}]
  %s1 = inlined_call_operand.hbm [shape: f32[8,32], index: 1, kind: input, shape index: {}]
  %s2 = inlined_call_operand.vmem [shape: f32[8,1], index: 2, kind: output, shape index: {}]
  %s3 = sld [smem:[#allocation0]]
  $region38: #{tpu_custom_call.1} parent=0
    _
  %s5 = ssub.s32 1, %s3
  %s6 = scalar_select 0, %s5, %s3
  $region1: #{tpu_custom_call.1} parent=0
    #allocation5 [shape = 'u8[4096]{0}', space=vmem, size = 0x1000, scoped, tag = 'input window, operand 0, single buffered']
    #allocation6 [shape = 's32[1]{0}', space=sflag, size = 0x4, scoped, tag = 'scoped memory for tpu_custom_call.1']
    #allocation7 [shape = 'u8[4096]{0}', space=vmem, size = 0x1000, scoped, tag = 'input window, operand 1, single buffered']
    #allocation8 [shape = 's32[1]{0}', space=sflag, size = 0x4, scoped, tag = 'scoped memory for tpu_custom_call.1']
    %7 = vsyncpa [#allocation6], 0
    %8 = vsyncpa [#allocation8], 0
    // Predicated region
    $region2: #{tpu_custom_call.1} parent=1 // pred_check
      _
    $region3: #{tpu_custom_call.1} parent=1 // pred_check_branch
      %10 = sbr.rel (0) target = $region5
    $region4: #{tpu_custom_call.1} parent=1 // pred_region
      %s12 = ssub.s32 128, 128
      %13 = vsyncadd [#allocation6], %s12
      %s15 = sshll.u32 [#allocation5], 4
      %s16 = int_to_ptr.vmem [resolvable:$true] %s15
      %18 = dma.hbm_to_vmem [thread:$0]  %s0, 128, %s16, [#allocation6]
    $region5: #{tpu_custom_call.1} parent=1 // pred_fallthru
      _
    // Predicated region
    $region6: #{tpu_custom_call.1} parent=1 // pred_check
      _
    $region7: #{tpu_custom_call.1} parent=1 // pred_check_branch
      %20 = sbr.rel (0) target = $region9
    $region8: #{tpu_custom_call.1} parent=1 // pred_region
      %s22 = ssub.s32 128, 128
      %23 = vsyncadd [#allocation8], %s22
      %s25 = sshll.u32 [#allocation7], 4
      %s26 = int_to_ptr.vmem [resolvable:$true] %s25
      %28 = dma.hbm_to_vmem [thread:$0]  %s1, 128, %s26, [#allocation8]
    $region9: #{tpu_custom_call.1} parent=1 // pred_fallthru
      _
    // Predicated region
    $region10: #{tpu_custom_call.1} parent=1 // pred_check
      _
    $region11: #{tpu_custom_call.1} parent=1 // pred_check_branch
      %30 = sbr.rel (0) target = $region13
    $region12: #{tpu_custom_call.1} parent=1 // pred_region
      %31 = dma.done [#allocation6], 128
    $region13: #{tpu_custom_call.1} parent=1 // pred_fallthru
      _
    // Predicated region
    $region14: #{tpu_custom_call.1} parent=1 // pred_check
      _
    $region15: #{tpu_custom_call.1} parent=1 // pred_check_branch
      %33 = sbr.rel (0) target = $region17
    $region16: #{tpu_custom_call.1} parent=1 // pred_region
      %34 = dma.done [#allocation8], 128
    $region17: #{tpu_custom_call.1} parent=1 // pred_fallthru
      _
    %p35 = scmp.eq.s32.totalorder 0, 0
    // Predicated region
    $region18: #{tpu_custom_call.1} parent=1 // pred_check
      %p36 = pneg %p35
    $region19: #{tpu_custom_call.1} parent=1 // pred_check_branch
      %38 = sbr.rel (%p36) target = $region21
    $region20: #{tpu_custom_call.1} parent=1 // pred_region
      %vm39 = vcmask 7168
      %40 = vst.msk [vmem:[#allocation2] sm:$0xff] %vm39, -inf
      %41 = vst.msk [vmem:[#allocation3] sm:$0xff] %vm39, 0.0
      %42 = vst.msk [vmem:[#allocation4] sm:$0xff] %vm39, 0.0
    $region21: #{tpu_custom_call.1} parent=1 // pred_fallthru
      _
    %v43 = vld [vmem:[#allocation5] sm:$0xff]
    %v44 = vld [vmem:[#allocation7] sm:$0xff]
    %vm45 = vcmask 261120
    %v47 = vsel %vm45, %v43, 0
    %v50 = vsel %vm45, %v44, 0
    %52 = vmatprep.subr.mxu0 0.0
    %53 = vmatpush1.xpose.msra.mxu0 %v50
    %54 = vmatprep.subr.mxu0 0.0
    %55 = vmatpush1.xpose.msra.mxu0 0.0
    %56 = vmatprep.subr.mxu0 0.0
    %57 = vmatpush1.xpose.msra.mxu0 0.0
    %58 = vmatprep.subr.mxu0 0.0
    %59 = vmatpush1.xpose.msra.mxu0 0.0
    %60 = vmatprep.subr.mxu0 0.0
    %61 = vmatpush1.xpose.msra.mxu0 0.0
    %62 = vmatprep.subr.mxu0 0.0
    %63 = vmatpush1.xpose.msra.mxu0 0.0
    %64 = vmatprep.subr.mxu0 0.0
    %65 = vmatpush1.xpose.msra.mxu0 0.0
    %66 = vmatprep.subr.mxu0 0.0
    %67 = vmatpush1.xpose.msra.mxu0 0.0
    %68 = vmatprep.subr.mxu0 0.0
    %69 = vmatpush1.xpose.msra.mxu0 0.0
    %70 = vmatprep.subr.mxu0 0.0
    %71 = vmatpush1.xpose.msra.mxu0 0.0
    %72 = vmatprep.subr.mxu0 0.0
    %73 = vmatpush1.xpose.msra.mxu0 0.0
    %74 = vmatprep.subr.mxu0 0.0
    %75 = vmatpush1.xpose.msra.mxu0 0.0
    %76 = vmatprep.subr.mxu0 0.0
    %77 = vmatpush1.xpose.msra.mxu0 0.0
    %78 = vmatprep.subr.mxu0 0.0
    %79 = vmatpush1.xpose.msra.mxu0 0.0
    %80 = vmatprep.subr.mxu0 0.0
    %81 = vmatpush1.xpose.msra.mxu0 0.0
    %82 = vmatprep.subr.mxu0 0.0
    %83 = vmatpush1.xpose.msra.mxu0 0.0
    %84 = vmatprep.subr.mxu0 0.0
    %85 = vmatpush1.xpose.msra.mxu0 0.0
    %86 = vmatprep.subr.mxu0 0.0
    %87 = vmatpush1.xpose.msra.mxu0 0.0
    %88 = vmatprep.subr.mxu0 0.0
    %89 = vmatpush1.xpose.msra.mxu0 0.0
    %90 = vmatprep.subr.mxu0 0.0
    %91 = vmatpush1.xpose.msra.mxu0 0.0
    %92 = vmatprep.subr.mxu0 0.0
    %93 = vmatpush1.xpose.msra.mxu0 0.0
    %94 = vmatprep.subr.mxu0 0.0
    %95 = vmatpush1.xpose.msra.mxu0 0.0
    %96 = vmatprep.subr.mxu0 0.0
    %97 = vmatpush1.xpose.msra.mxu0 0.0
    %98 = vmatprep.subr.mxu0 0.0
    %99 = vmatpush1.xpose.msra.mxu0 0.0
    %100 = vmatprep.subr.mxu0 0.0
    %101 = vmatpush1.xpose.msra.mxu0 0.0
    %102 = vmatprep.subr.mxu0 0.0
    %103 = vmatpush1.xpose.msra.mxu0 0.0
    %104 = vmatprep.subr.mxu0 0.0
    %105 = vmatpush1.xpose.msra.mxu0 0.0
    %106 = vmatprep.subr.mxu0 0.0
    %107 = vmatpush1.xpose.msra.mxu0 0.0
    %108 = vmatprep.subr.mxu0 0.0
    %109 = vmatpush1.xpose.msra.mxu0 0.0
    %110 = vmatprep.subr.mxu0 0.0
    %111 = vmatpush1.xpose.msra.mxu0 0.0
    %112 = vmatprep.subr.mxu0 0.0
    %113 = vmatpush1.xpose.msra.mxu0 0.0
    %114 = vmatprep.subr.mxu0 0.0
    %115 = vmatpush1.xpose.msra.mxu0 0.0
    %116 = vmatprep.mubr.f32.mxu0 0.0
    %117 = vmatmul.mubr.f32.gmra.mrb[0].mxu0 %v47
    %v118 = vpop.f32.mrb[0].mxu0
    %v119 = vadd.f32 0.0, %v118
    %v120 = vpop.f32.mrb[0].mxu0
    %121 = vdwg.mxu0
    %v122 = vmul.f32 %v119, 2.0
    %v123 = vmul.f32 %v122, 1.442695
    %v124 = vpow.pop %v123
    %s125 = smul.u32 0, 8
    %v126 = vlaneseq
    %v127 = vshrl.u32 %v126, 7
    %v128 = vstv %s125
    %v129 = vadd.s32 %v128, %v127
    %s130 = smul.u32 0, 8
    %v131 = vlaneseq
    %v132 = vand.u32 %v131, 127
    %v133 = vstv %s130
    %v134 = vadd.s32 %v133, %v132
    %vm135 = vcmp.eq.s32.totalorder %v129, %v134
    %vm136 = vcmp.ge.s32.totalorder %v134, 8
    %vm137 = vmor %vm135, %vm136
    %v138 = vsel %vm137, -inf, %v124
    %v139 = vld [vmem:[#allocation2] sm:$0xff]
    %vm140 = vcmask 64512
    %v141 = vsel %vm140, %v138, -inf
    %142 = vmax.xlane.f32.xlu0 %v141
    %v143 = vpop.xlane.xlu0 %142
    %v144 = vmax.f32 %v139, %v143
    %v145 = vsub.f32 %v139, %v144
    %v146 = vmul.f32 %v145, 1.442695
    %v147 = vpow.pop %v146
    %v148 = vld [vmem:[#allocation3] sm:$0xff]
    %v149 = vmul.f32 %v147, %v148
    %151 = vset.pattern.permute.xlu0 0
    %152 = vperm.xlu0 %151, %v144
    %v153 = vpop.permute.xlu0 %152
    %v155 = vsub.f32 %v138, %v153
    %v156 = vmul.f32 %v155, 1.442695
    %v157 = vpow.pop %v156
    %v158 = vsel %vm140, %v157, 0.0
    %159 = vadd.xlane.f32.xlu0 %v158
    %v160 = vpop.xlane.xlu0 %159
    %v161 = vadd.f32 %v149, %v160
    %vm162 = vcmask 7168
    %163 = vst.msk [vmem:[#allocation3] sm:$0xff] %vm162, %v161
    %164 = vst.msk [vmem:[#allocation2] sm:$0xff] %vm162, %v144
    %s165 = sadd.s32 %s125, 8
    %p166 = scmp.le.s32.totalorder %s130, %s165
    %s167 = sadd.s32 %s130, 8
    %s168 = sadd.s32 %s125, 1
    %p169 = scmp.gt.s32.totalorder %s167, %s168
    %p170 = pnand %p166, %p169
    %p171 = pneg %p170
    %p172 = scmp.le.s32.totalorder %s125, 7
    %p173 = pnand %p35, %p172
    %p174 = pneg %p173
    %p175 = scmp.gt.s32.totalorder %s165, 7
    %p176 = pnand %p174, %p175
    %p177 = pneg %p176
    %p178 = por %p171, %p177
    // Predicated region
    $region22: #{tpu_custom_call.1} parent=1 // pred_check
      %p179 = pneg %p178
    $region23: #{tpu_custom_call.1} parent=1 // pred_check_branch
      %181 = sbr.rel (%p179) target = $region25
    $region24: #{tpu_custom_call.1} parent=1 // pred_region
      %vm182 = vcmp.eq.s32.totalorder %v129, 7
      %v183 = vadd.s32 %v129, 1
      %v184 = vsel %vm182, 0, %v183
      %v185 = vld [vmem:[#allocation4] sm:$0xff]
      %vm186 = vcmp.eq.s32.totalorder %v134, %v184
      %v187 = vsel %vm186, %v124, 0.0
      %v188 = vsel %vm140, %v187, 0.0
      %189 = vadd.xlane.f32.xlu0 %v188
      %v190 = vpop.xlane.xlu0 %189
      %v191 = vadd.f32 %v185, %v190
      %192 = vst.msk [vmem:[#allocation4] sm:$0xff] %vm162, %v191
    $region25: #{tpu_custom_call.1} parent=1 // pred_fallthru
      _
    // Predicated region
    $region26: #{tpu_custom_call.1} parent=1 // pred_check
      %p193 = pneg %p35
    $region27: #{tpu_custom_call.1} parent=1 // pred_check_branch
      %195 = sbr.rel (%p193) target = $region29
    $region28: #{tpu_custom_call.1} parent=1 // pred_region
      %v196 = vld [vmem:[#allocation2] sm:$0xff]
      %v197 = vld [vmem:[#allocation3] sm:$0xff]
      %v198 = vlog2.pop %v197
      %v199 = vmul.f32 %v198, 0.6931472
      %v200 = vadd.f32 %v196, %v199
      %v201 = vld [vmem:[#allocation4] sm:$0xff]
      %v202 = vsub.f32 %v200, %v201
      %203 = vst.msk [vmem:[%s2] sm:$0xff] %vm162, %v202
    $region29: #{tpu_custom_call.1} parent=1 // pred_fallthru
      _
    // Predicated region
    $region30: #{tpu_custom_call.1} parent=1 // pred_check
      _
    $region31: #{tpu_custom_call.1} parent=1 // pred_check_branch
      %205 = sbr.rel (0) target = $region33
    $region32: #{tpu_custom_call.1} parent=1 // pred_region
      _
    $region33: #{tpu_custom_call.1} parent=1 // pred_fallthru
      _
    // Predicated region
    $region34: #{tpu_custom_call.1} parent=1 // pred_check
      _
    $region35: #{tpu_custom_call.1} parent=1 // pred_check_branch
      %207 = sbr.rel (0) target = $region37
    $region36: #{tpu_custom_call.1} parent=1 // pred_region
      _
    $region37: #{tpu_custom_call.1} parent=1 // pred_fallthru
      _
    %208 = vsyncpa [#allocation6], 1
    %209 = vsyncpa [#allocation8], 1

</llo_original>
